<compile_context>
chip_gen: v7x
topology: tpu7x:2x2x1
jax: 0.10.0
libtpu: 0.0.40
codegen_flags: <defaults>
</compile_context>

<pallas_src>
import functools

import jax
import jax.numpy as jnp
from jax.experimental import pallas as pl
from jax.experimental.pallas import tpu as pltpu


def _embedfc_kernel(x_ref, w1_ref, b1_ref, w2_ref, b2_ref, o_ref):
    # Linear 1 on the MXU with f32 accumulation.
    h = jnp.dot(x_ref[...], w1_ref[...], preferred_element_type=jnp.float32)
    h = h + b1_ref[...].astype(jnp.float32)
    # Exact GELU (matches torch.nn.GELU(approximate='none')), computed in f32:
    #   gelu(x) = 0.5 * x * (1 + erf(x / sqrt(2)))
    inv_sqrt2 = jnp.float32(0.7071067811865476)
    h = 0.5 * h * (1.0 + jax.lax.erf(h * inv_sqrt2))
    # Linear 2: cast the activation to the weight dtype so bf16 weights take
    # the bf16 MXU path; accumulation stays f32.
    out = jnp.dot(h.astype(w2_ref.dtype), w2_ref[...],
                  preferred_element_type=jnp.float32)
    out = out + b2_ref[...].astype(jnp.float32)
    o_ref[...] = out.astype(o_ref.dtype)


def _block_diag(w, k):
    """kron(I_k, w): k copies of w on the block diagonal (exact zeros off-diag)."""
    if k == 1:
        return w
    return jnp.kron(jnp.eye(k, dtype=w.dtype), w)


@functools.partial(
    jax.jit, static_argnames=("input_dim", "tm", "use_bf16_operands"))
def embed_fc(x, w1_t, b1, w2_t, b2, *, input_dim, tm=1024,
             use_bf16_operands=False):
    """EmbedFC forward.

    Args:
      x:    any shape whose elements flatten to (-1, input_dim)
      w1_t: (input_dim, emb_dim)   -- torch W1 transposed
      b1:   (emb_dim,)
      w2_t: (emb_dim, emb_dim)     -- torch W2 transposed
      b2:   (emb_dim,)
      tm:   row tile in *packed* rows (multiple of 8; sweep 512-2048)
      use_bf16_operands: cast x / W1 / W2 to bf16 for the MXU (f32 accumulate,
        f32 GELU/bias).  Halves HBM traffic on v6e/v7x.
    Returns: (N, emb_dim) with N = x.size // input_dim, dtype of x.
    """
    emb_dim = w1_t.shape[1]
    assert w1_t.shape == (input_dim, emb_dim)
    assert w2_t.shape == (emb_dim, emb_dim)
    assert tm > 0 and tm % 8 == 0, "tm must be a positive multiple of 8"
    out_dtype = x.dtype

    x2 = x.reshape(-1, input_dim)          # x.view(-1, input_dim)
    n = x2.shape[0]

    # ---- Lane-dense output packing -------------------------------------
    # With emb_dim < 128 a (tm, emb_dim) output block would be stored with
    # masked vst.msk on a half-empty lane axis.  Fold `pack` consecutive rows
    # into one kernel row via block-diagonal weights so stores are full
    # 128-lane unmasked vst.
    if emb_dim < 128 and 128 % emb_dim == 0:
        pack = 128 // emb_dim
    else:
        pack = 1

    w1_k = _block_diag(w1_t, pack)                     # (pack*in, pack*emb)
    w2_k = _block_diag(w2_t, pack)                     # (pack*emb, pack*emb)
    b1_k = jnp.tile(b1, pack).reshape(1, pack * emb_dim).astype(jnp.float32)
    b2_k = jnp.tile(b2, pack).reshape(1, pack * emb_dim).astype(jnp.float32)
    din_k = pack * input_dim
    demb_k = pack * emb_dim

    if use_bf16_operands:
        x2 = x2.astype(jnp.bfloat16)
        w1_k = w1_k.astype(jnp.bfloat16)
        w2_k = w2_k.astype(jnp.bfloat16)

    # ---- Row padding: no divisibility requirement on N ------------------
    n_packed = -(-n // pack)                            # ceil(n / pack)
    tm_eff = min(tm, -(-n_packed // 8) * 8)             # >=8, multiple of 8
    n_packed_pad = -(-n_packed // tm_eff) * tm_eff
    n_pad = n_packed_pad * pack
    if n_pad != n:
        x2 = jnp.pad(x2, ((0, n_pad - n), (0, 0)))      # zero rows; sliced off later
    xk = x2.reshape(n_packed_pad, din_k)                # free row-major reinterpret

    grid = (n_packed_pad // tm_eff,)
    out_packed = pl.pallas_call(
        _embedfc_kernel,
        out_shape=jax.ShapeDtypeStruct((n_packed_pad, demb_k), out_dtype),
        grid_spec=pltpu.PrefetchScalarGridSpec(
            num_scalar_prefetch=0,
            grid=grid,
            in_specs=[
                pl.BlockSpec((tm_eff, din_k), lambda i: (i, 0)),    # x rows
                # Grid-invariant blocks below: constant index_map, held in
                # VMEM across steps (not re-DMA'd per iteration).
                pl.BlockSpec((din_k, demb_k), lambda i: (0, 0)),    # blkdiag W1^T
                pl.BlockSpec((1, demb_k), lambda i: (0, 0)),        # b1
                pl.BlockSpec((demb_k, demb_k), lambda i: (0, 0)),   # blkdiag W2^T
                pl.BlockSpec((1, demb_k), lambda i: (0, 0)),        # b2
            ],
            out_specs=pl.BlockSpec((tm_eff, demb_k), lambda i: (i, 0)),
        ),
        compiler_params=pltpu.CompilerParams(
            dimension_semantics=("parallel",),   # shards batch over v7x's 2 TCs
            vmem_limit_bytes=32 * 1024 * 1024,   # safe on v5e/v6e/v7x; plenty for tm<=2048
        ),
    )(xk, w1_k, b1_k, w2_k, b2_k)

    # Free row-major reinterpret back to (N, emb_dim); drop padded rows.
    out = out_packed.reshape(n_pad, emb_dim)[:n]
    return out


def _reference(x, w1_t, b1, w2_t, b2, input_dim):
    x2 = x.reshape(-1, input_dim).astype(jnp.float32)
    h = x2 @ w1_t.astype(jnp.float32) + b1
    h = jax.nn.gelu(h, approximate=False)
    return h @ w2_t.astype(jnp.float32) + b2


if __name__ == "__main__":
    input_dim = 16
    emb_dim = 64

    key = jax.random.PRNGKey(0)
    kx, kw1, kb1, kw2, kb2, kx2 = jax.random.split(key, 6)

    # Deterministic parameters (Linear weights stored pre-transposed as (in, out)).
    w1_t = jax.random.normal(kw1, (input_dim, emb_dim), dtype=jnp.float32) * 0.1
    b1 = jax.random.normal(kb1, (emb_dim,), dtype=jnp.float32) * 0.1
    w2_t = jax.random.normal(kw2, (emb_dim, emb_dim), dtype=jnp.float32) * 0.1
    b2 = jax.random.normal(kb2, (emb_dim,), dtype=jnp.float32) * 0.1

    # Case 1: small input (2, 8, 16) -> view(-1, 16) gives N = 16 rows, f32.
    x = jax.random.normal(kx, (2, 8, input_dim), dtype=jnp.float32)
    out = jax.block_until_ready(
        embed_fc(x, w1_t, b1, w2_t, b2, input_dim=input_dim))
    ref = _reference(x, w1_t, b1, w2_t, b2, input_dim)
    assert out.shape == (16, emb_dim), out.shape
    assert jnp.allclose(out, ref, atol=1e-4, rtol=1e-4), float(
        jnp.max(jnp.abs(out - ref)))

    # Case 2: ragged row count (N = 210, not a multiple of pack or tile)
    # exercises the pad-and-slice path (no divisibility requirement on N).
    x_r = jax.random.normal(kx2, (3, 70, input_dim), dtype=jnp.float32)
    out_r = jax.block_until_ready(
        embed_fc(x_r, w1_t, b1, w2_t, b2, input_dim=input_dim))
    ref_r = _reference(x_r, w1_t, b1, w2_t, b2, input_dim)
    assert out_r.shape == (210, emb_dim), out_r.shape
    assert jnp.allclose(out_r, ref_r, atol=1e-4, rtol=1e-4), float(
        jnp.max(jnp.abs(out_r - ref_r)))

    # Case 3: bf16 MXU operands (f32 accumulate + f32 GELU/bias inside kernel).
    out_bf = jax.block_until_ready(
        embed_fc(x, w1_t, b1, w2_t, b2, input_dim=input_dim,
                 use_bf16_operands=True))
    assert out_bf.shape == (16, emb_dim), out_bf.shape
    assert jnp.allclose(out_bf, ref, atol=1e-1, rtol=1e-1), float(
        jnp.max(jnp.abs(out_bf - ref)))

    print("KERNEL_OK")
</pallas_src>

<mosaic_0001>
module attributes {stable_mosaic.version = 11 : i64} {
  func.func @_embedfc_kernel(%arg0: i32, %arg1: memref<8x32xf32, #tpu.memory_space<vmem>>, %arg2: memref<32x128xf32, #tpu.memory_space<vmem>>, %arg3: memref<1x128xf32, #tpu.memory_space<vmem>>, %arg4: memref<128x128xf32, #tpu.memory_space<vmem>>, %arg5: memref<1x128xf32, #tpu.memory_space<vmem>>, %arg6: memref<8x128xf32, #tpu.memory_space<vmem>>) attributes {dimension_semantics = [#tpu.dimension_semantics<parallel>], iteration_bounds = array<i64: 1>, scalar_prefetch = 0 : i64, scratch_operands = 0 : i64, tpu.core_type = #tpu.core_type<tc>, window_params = [{transform_indices = @transform_0, window_bounds = array<i64: 8, 32>}, {pipeline_mode = #tpu.pipeline_mode<synchronous>, transform_indices = @transform_1, window_bounds = array<i64: 32, 128>}, {pipeline_mode = #tpu.pipeline_mode<synchronous>, transform_indices = @transform_2, window_bounds = array<i64: 1, 128>}, {pipeline_mode = #tpu.pipeline_mode<synchronous>, transform_indices = @transform_3, window_bounds = array<i64: 128, 128>}, {pipeline_mode = #tpu.pipeline_mode<synchronous>, transform_indices = @transform_4, window_bounds = array<i64: 1, 128>}, {transform_indices = @transform_5, window_bounds = array<i64: 8, 128>}]} {
    %c0 = arith.constant 0 : index
    %c0_0 = arith.constant 0 : index
    %0 = vector.load %arg1[%c0, %c0_0] : memref<8x32xf32, #tpu.memory_space<vmem>>, vector<8x32xf32>
    %c0_1 = arith.constant 0 : index
    %c0_2 = arith.constant 0 : index
    %1 = vector.load %arg2[%c0_1, %c0_2] : memref<32x128xf32, #tpu.memory_space<vmem>>, vector<32x128xf32>
    %cst = arith.constant dense<0.000000e+00> : vector<8x128xf32>
    %2 = tpu.matmul %0, %1, %cst {dimension_numbers = #tpu.dot_dimension_numbers<[1], [0], [0], [1], [0, 0, 1, 1], [], []>} : vector<8x32xf32>, vector<32x128xf32>, vector<8x128xf32> -> vector<8x128xf32>
    %c0_3 = arith.constant 0 : index
    %c0_4 = arith.constant 0 : index
    %3 = vector.load %arg3[%c0_3, %c0_4] : memref<1x128xf32, #tpu.memory_space<vmem>>, vector<1x128xf32>
    %4 = vector.broadcast %3 : vector<1x128xf32> to vector<8x128xf32>
    %5 = arith.addf %2, %4 : vector<8x128xf32>
    %cst_5 = arith.constant 5.000000e-01 : f32
    %6 = vector.broadcast %cst_5 : f32 to vector<8x128xf32>
    %7 = arith.mulf %6, %5 : vector<8x128xf32>
    %cst_6 = arith.constant 0.707106769 : f32
    %8 = vector.broadcast %cst_6 : f32 to vector<8x128xf32>
    %9 = arith.mulf %5, %8 : vector<8x128xf32>
    %10 = math.erf %9 : vector<8x128xf32>
    %cst_7 = arith.constant 1.000000e+00 : f32
    %11 = vector.broadcast %cst_7 : f32 to vector<8x128xf32>
    %12 = arith.addf %11, %10 : vector<8x128xf32>
    %13 = arith.mulf %7, %12 : vector<8x128xf32>
    %c0_8 = arith.constant 0 : index
    %c0_9 = arith.constant 0 : index
    %14 = vector.load %arg4[%c0_8, %c0_9] : memref<128x128xf32, #tpu.memory_space<vmem>>, vector<128x128xf32>
    %cst_10 = arith.constant dense<0.000000e+00> : vector<8x128xf32>
    %15 = tpu.matmul %13, %14, %cst_10 {dimension_numbers = #tpu.dot_dimension_numbers<[1], [0], [0], [1], [0, 0, 1, 1], [], []>} : vector<8x128xf32>, vector<128x128xf32>, vector<8x128xf32> -> vector<8x128xf32>
    %c0_11 = arith.constant 0 : index
    %c0_12 = arith.constant 0 : index
    %16 = vector.load %arg5[%c0_11, %c0_12] : memref<1x128xf32, #tpu.memory_space<vmem>>, vector<1x128xf32>
    %17 = vector.broadcast %16 : vector<1x128xf32> to vector<8x128xf32>
    %18 = arith.addf %15, %17 : vector<8x128xf32>
    %c0_13 = arith.constant 0 : index
    %c0_14 = arith.constant 0 : index
    %19 = vector.load %arg6[%c0_13, %c0_14] : memref<8x128xf32, #tpu.memory_space<vmem>>, vector<8x128xf32>
    tpu.vector_store %arg6[%c0_13, %c0_14], %18 {strides = array<i32>} : memref<8x128xf32, #tpu.memory_space<vmem>>, vector<8x128xf32>,
    return
  }
  func.func @transform_0(%arg0: i32) -> (i32, i32) {
    %c0_i32 = arith.constant 0 : i32
    %c0_i32_0 = arith.constant 0 : i32
    return %arg0, %c0_i32 : i32, i32
  }
  func.func @transform_1(%arg0: i32) -> (i32, i32) {
    %c0_i32 = arith.constant 0 : i32
    %c0_i32_0 = arith.constant 0 : i32
    %c0_i32_1 = arith.constant 0 : i32
    return %c0_i32, %c0_i32_0 : i32, i32
  }
  func.func @transform_2(%arg0: i32) -> (i32, i32) {
    %c0_i32 = arith.constant 0 : i32
    %c0_i32_0 = arith.constant 0 : i32
    %c0_i32_1 = arith.constant 0 : i32
    return %c0_i32, %c0_i32_0 : i32, i32
  }
  func.func @transform_3(%arg0: i32) -> (i32, i32) {
    %c0_i32 = arith.constant 0 : i32
    %c0_i32_0 = arith.constant 0 : i32
    %c0_i32_1 = arith.constant 0 : i32
    return %c0_i32, %c0_i32_0 : i32, i32
  }
  func.func @transform_4(%arg0: i32) -> (i32, i32) {
    %c0_i32 = arith.constant 0 : i32
    %c0_i32_0 = arith.constant 0 : i32
    %c0_i32_1 = arith.constant 0 : i32
    return %c0_i32, %c0_i32_0 : i32, i32
  }
  func.func @transform_5(%arg0: i32) -> (i32, i32) {
    %c0_i32 = arith.constant 0 : i32
    %c0_i32_0 = arith.constant 0 : i32
    return %arg0, %c0_i32 : i32, i32
  }
}

</mosaic_0001>

<llo_original>
// kernel: tile.13
$region0: #{tile.13}
  #allocation0 [shape = 's32[1]{0}', space=sflag, size = 0x4, scoped, tag = 'scoped memory for tile.13']
  %s0 = inlined_call_operand.vmem [shape: f32[64], index: 0, kind: input, shape index: {}]
  %s1 = inlined_call_operand.vmem [shape: f32[2,64], index: 1, kind: output, shape index: {}]
  // Predicated region
  $region2: #{tile.13} parent=0 // pred_check
    _
  $region3: #{tile.13} parent=0 // pred_check_branch
    %3 = sbr.rel (0) target = $region5
  $region4: #{tile.13} parent=0 // pred_region
    _
  $region5: #{tile.13} parent=0 // pred_fallthru
    _
  %v4 = vld [vmem:[%s0] ss:$0 sm:$0xff]
  %5 = vst [vmem:[%s1] sm:$0x3] %v4

// kernel: tile.14
$region0: #{tile.14}
  %s0 = inlined_call_operand.vmem [shape: f32[2,64], index: 0, kind: input, shape index: {}]
  %s1 = inlined_call_operand.vmem [shape: f32[1,128], index: 1, kind: output, shape index: {}]
  $region1: #{tile.14} parent=0
    #allocation0 [shape = 'u8[4096]{0}', space=vmem, size = 0x1000, scoped, tag = 'scoped mem for output reshape']
    #allocation1 [shape = 'u8[4096]{0}', space=vmem, size = 0x1000, scoped, tag = 'scoped mem for input reshape']
    %s3 = sshllo.u32 0, 2
    %v4 = vld [vmem:[%s0] sm:%s3]
    %5 = vst [vmem:[#allocation1] sm:%s3] %v4
    %v6 = vld [vmem:[#allocation1] sm:$0x1]
    %vm7 = vcmask 523264
    %8 = vst.msk [vmem:[#allocation0] sm:$0x1] %vm7, %v6
    %s9 = scalar_lea.vmem [#allocation1], 1
    %v10 = vld [vmem:[%s9] sm:$0x1]
    %11 = vrot.lane.b32.xlu0 %v10, 64
    %v12 = vpop.permute.xlu0 %11
    %vm13 = vcmask 1048064
    %14 = vst.msk [vmem:[#allocation0] sm:$0x1] %vm13, %v12
    %s16 = sshllo.u32 0, 1
    %v18 = vld [vmem:[#allocation0] sm:%s16]
    %s19 = sshllo.u32 0, 1
    %20 = vst [vmem:[%s1] sm:%s19] %v18

// kernel: embed_fc.1
$region0: #{embed_fc.1}
  #allocation0 [shape = 'u32[]', space=smem, size = 0x4, offset = 0x4, fixed_abs, tag = 'smem constant byte address 0x4 - core index']
  #allocation1 [shape = 'u32[144,128]{1,0:T(1,128)}', space=vmem, size = 0x12000, scoped, tag = 'internal scratch']
  %s0 = inlined_call_operand.vmem [shape: f32[8,32], index: 0, kind: input, shape index: {}]
  %s1 = inlined_call_operand.vmem [shape: f32[32,128], index: 1, kind: input, shape index: {}]
  %s2 = inlined_call_operand.vmem [shape: f32[1,128], index: 2, kind: input, shape index: {}]
  %s3 = inlined_call_operand.vmem [shape: f32[128,128], index: 3, kind: input, shape index: {}]
  %s4 = inlined_call_operand.vmem [shape: f32[1,128], index: 4, kind: input, shape index: {}]
  %s5 = inlined_call_operand.vmem [shape: f32[8,128], index: 5, kind: output, shape index: {}]
  %s6 = sld [smem:[#allocation0]]
  $region30: #{embed_fc.1} parent=0
    _
  %s8 = ssub.s32 1, %s6
  %s9 = scalar_select 0, %s8, %s6
  // Predicated region
  $region2: #{embed_fc.1} parent=0 // pred_check
    _
  $region3: #{embed_fc.1} parent=0 // pred_check_branch
    %11 = sbr.rel (0) target = $region5
  $region4: #{embed_fc.1} parent=0 // pred_region
    _
  $region5: #{embed_fc.1} parent=0 // pred_fallthru
    _
  // Predicated region
  $region6: #{embed_fc.1} parent=0 // pred_check
    _
  $region7: #{embed_fc.1} parent=0 // pred_check_branch
    %13 = sbr.rel (0) target = $region9
  $region8: #{embed_fc.1} parent=0 // pred_region
    _
  $region9: #{embed_fc.1} parent=0 // pred_fallthru
    _
  // Predicated region
  $region10: #{embed_fc.1} parent=0 // pred_check
    _
  $region11: #{embed_fc.1} parent=0 // pred_check_branch
    %15 = sbr.rel (0) target = $region13
  $region12: #{embed_fc.1} parent=0 // pred_region
    _
  $region13: #{embed_fc.1} parent=0 // pred_fallthru
    _
  // Predicated region
  $region14: #{embed_fc.1} parent=0 // pred_check
    _
  $region15: #{embed_fc.1} parent=0 // pred_check_branch
    %17 = sbr.rel (0) target = $region17
  $region16: #{embed_fc.1} parent=0 // pred_region
    _
  $region17: #{embed_fc.1} parent=0 // pred_fallthru
    _
  // Predicated region
  $region18: #{embed_fc.1} parent=0 // pred_check
    _
  $region19: #{embed_fc.1} parent=0 // pred_check_branch
    %19 = sbr.rel (0) target = $region21
  $region20: #{embed_fc.1} parent=0 // pred_region
    _
  $region21: #{embed_fc.1} parent=0 // pred_fallthru
    _
  %v20 = vld [vmem:[%s0] sm:$0xff]
  %v21 = vld [vmem:[%s1] sm:$0xff]
  %v22 = vld [vmem:[%s1 + $0x8] sm:$0xff]
  %v23 = vld [vmem:[%s1 + $0x10] sm:$0xff]
  %v24 = vld [vmem:[%s1 + $0x18] sm:$0xff]
  %v25 = vld [vmem:[%s2] sm:$0x1]
  %v27 = vlaneseq
  %v28 = vshrl.u32 %v27, 7
  %v29 = vsub.s32 0, %v28
  %v30 = vrot.slane %v25, %v29
  %vm32 = vcmask 261120
  %v34 = vsel %vm32, %v20, 0
  %36 = vmatprep.subr.mxu0 0.0
  %37 = vmatpush1.msra.mxu0 %v21
  %38 = vmatprep.subr.mxu0 0.0
  %39 = vmatpush1.msra.mxu0 %v22
  %40 = vmatprep.subr.mxu0 0.0
  %41 = vmatpush1.msra.mxu0 %v23
  %42 = vmatprep.subr.mxu0 0.0
  %43 = vmatpush1.msra.mxu0 %v24
  %44 = vmatprep.subr.mxu0 0.0
  %45 = vmatpush1.msra.mxu0 0.0
  %46 = vmatprep.subr.mxu0 0.0
  %47 = vmatpush1.msra.mxu0 0.0
  %48 = vmatprep.subr.mxu0 0.0
  %49 = vmatpush1.msra.mxu0 0.0
  %50 = vmatprep.subr.mxu0 0.0
  %51 = vmatpush1.msra.mxu0 0.0
  %52 = vmatprep.subr.mxu0 0.0
  %53 = vmatpush1.msra.mxu0 0.0
  %54 = vmatprep.subr.mxu0 0.0
  %55 = vmatpush1.msra.mxu0 0.0
  %56 = vmatprep.subr.mxu0 0.0
  %57 = vmatpush1.msra.mxu0 0.0
  %58 = vmatprep.subr.mxu0 0.0
  %59 = vmatpush1.msra.mxu0 0.0
  %60 = vmatprep.subr.mxu0 0.0
  %61 = vmatpush1.msra.mxu0 0.0
  %62 = vmatprep.subr.mxu0 0.0
  %63 = vmatpush1.msra.mxu0 0.0
  %64 = vmatprep.subr.mxu0 0.0
  %65 = vmatpush1.msra.mxu0 0.0
  %66 = vmatprep.subr.mxu0 0.0
  %67 = vmatpush1.msra.mxu0 0.0
  %68 = vmatprep.subr.mxu0 0.0
  %69 = vmatpush1.msra.mxu0 0.0
  %70 = vmatprep.subr.mxu0 0.0
  %71 = vmatpush1.msra.mxu0 0.0
  %72 = vmatprep.subr.mxu0 0.0
  %73 = vmatpush1.msra.mxu0 0.0
  %74 = vmatprep.subr.mxu0 0.0
  %75 = vmatpush1.msra.mxu0 0.0
  %76 = vmatprep.subr.mxu0 0.0
  %77 = vmatpush1.msra.mxu0 0.0
  %78 = vmatprep.subr.mxu0 0.0
  %79 = vmatpush1.msra.mxu0 0.0
  %80 = vmatprep.subr.mxu0 0.0
  %81 = vmatpush1.msra.mxu0 0.0
  %82 = vmatprep.subr.mxu0 0.0
  %83 = vmatpush1.msra.mxu0 0.0
  %84 = vmatprep.subr.mxu0 0.0
  %85 = vmatpush1.msra.mxu0 0.0
  %86 = vmatprep.subr.mxu0 0.0
  %87 = vmatpush1.msra.mxu0 0.0
  %88 = vmatprep.subr.mxu0 0.0
  %89 = vmatpush1.msra.mxu0 0.0
  %90 = vmatprep.subr.mxu0 0.0
  %91 = vmatpush1.msra.mxu0 0.0
  %92 = vmatprep.subr.mxu0 0.0
  %93 = vmatpush1.msra.mxu0 0.0
  %94 = vmatprep.subr.mxu0 0.0
  %95 = vmatpush1.msra.mxu0 0.0
  %96 = vmatprep.subr.mxu0 0.0
  %97 = vmatpush1.msra.mxu0 0.0
  %98 = vmatprep.subr.mxu0 0.0
  %99 = vmatpush1.msra.mxu0 0.0
  %100 = vmatprep.mubr.f32.mxu0 0.0
  %101 = vmatmul.mubr.f32.gmra.mrb[0].mxu0 %v34
  %v102 = vpop.f32.mrb[0].mxu0
  %v103 = vadd.f32 %v30, %v102
  %v104 = vpop.f32.mrb[0].mxu0
  %105 = vdwg.mxu0
  %v106 = vmul.f32 %v103, 0.5
  %v107 = vmul.f32 %v103, 0.70710677
  %v108 = verf.f32.pop %v107
  %v109 = vadd.f32 %v108, 1.0
  %v110 = vmul.f32 %v106, %v109
  %v111 = vld [vmem:[%s3] sm:$0xff]
  %v112 = vld [vmem:[%s3 + $0x8] sm:$0xff]
  %v113 = vld [vmem:[%s3 + $0x10] sm:$0xff]
  %v114 = vld [vmem:[%s3 + $0x18] sm:$0xff]
  %v115 = vld [vmem:[%s3 + $0x20] sm:$0xff]
  %v116 = vld [vmem:[%s3 + $0x28] sm:$0xff]
  %v117 = vld [vmem:[%s3 + $0x30] sm:$0xff]
  %v118 = vld [vmem:[%s3 + $0x38] sm:$0xff]
  %v119 = vld [vmem:[%s3 + $0x40] sm:$0xff]
  %v120 = vld [vmem:[%s3 + $0x48] sm:$0xff]
  %v121 = vld [vmem:[%s3 + $0x50] sm:$0xff]
  %v122 = vld [vmem:[%s3 + $0x58] sm:$0xff]
  %v123 = vld [vmem:[%s3 + $0x60] sm:$0xff]
  %v124 = vld [vmem:[%s3 + $0x68] sm:$0xff]
  %v125 = vld [vmem:[%s3 + $0x70] sm:$0xff]
  %v126 = vld [vmem:[%s3 + $0x78] sm:$0xff]
  %v127 = vld [vmem:[%s4] sm:$0x1]
  %v129 = vlaneseq
  %v130 = vshrl.u32 %v129, 7
  %v131 = vsub.s32 0, %v130
  %v132 = vrot.slane %v127, %v131
  %134 = vmatprep.subr.mxu0 0.0
  %135 = vmatpush1.msra.mxu0 %v111
  %136 = vmatprep.subr.mxu0 0.0
  %137 = vmatpush1.msra.mxu0 %v112
  %138 = vmatprep.subr.mxu0 0.0
  %139 = vmatpush1.msra.mxu0 %v113
  %140 = vmatprep.subr.mxu0 0.0
  %141 = vmatpush1.msra.mxu0 %v114
  %142 = vmatprep.subr.mxu0 0.0
  %143 = vmatpush1.msra.mxu0 %v115
  %144 = vmatprep.subr.mxu0 0.0
  %145 = vmatpush1.msra.mxu0 %v116
  %146 = vmatprep.subr.mxu0 0.0
  %147 = vmatpush1.msra.mxu0 %v117
  %148 = vmatprep.subr.mxu0 0.0
  %149 = vmatpush1.msra.mxu0 %v118
  %150 = vmatprep.subr.mxu0 0.0
  %151 = vmatpush1.msra.mxu0 %v119
  %152 = vmatprep.subr.mxu0 0.0
  %153 = vmatpush1.msra.mxu0 %v120
  %154 = vmatprep.subr.mxu0 0.0
  %155 = vmatpush1.msra.mxu0 %v121
  %156 = vmatprep.subr.mxu0 0.0
  %157 = vmatpush1.msra.mxu0 %v122
  %158 = vmatprep.subr.mxu0 0.0
  %159 = vmatpush1.msra.mxu0 %v123
  %160 = vmatprep.subr.mxu0 0.0
  %161 = vmatpush1.msra.mxu0 %v124
  %162 = vmatprep.subr.mxu0 0.0
  %163 = vmatpush1.msra.mxu0 %v125
  %164 = vmatprep.subr.mxu0 0.0
  %165 = vmatpush1.msra.mxu0 %v126
  %166 = vmatprep.subr.mxu0 0.0
  %167 = vmatpush1.msra.mxu0 0.0
  %168 = vmatprep.subr.mxu0 0.0
  %169 = vmatpush1.msra.mxu0 0.0
  %170 = vmatprep.subr.mxu0 0.0
  %171 = vmatpush1.msra.mxu0 0.0
  %172 = vmatprep.subr.mxu0 0.0
  %173 = vmatpush1.msra.mxu0 0.0
  %174 = vmatprep.subr.mxu0 0.0
  %175 = vmatpush1.msra.mxu0 0.0
  %176 = vmatprep.subr.mxu0 0.0
  %177 = vmatpush1.msra.mxu0 0.0
  %178 = vmatprep.subr.mxu0 0.0
  %179 = vmatpush1.msra.mxu0 0.0
  %180 = vmatprep.subr.mxu0 0.0
  %181 = vmatpush1.msra.mxu0 0.0
  %182 = vmatprep.subr.mxu0 0.0
  %183 = vmatpush1.msra.mxu0 0.0
  %184 = vmatprep.subr.mxu0 0.0
  %185 = vmatpush1.msra.mxu0 0.0
  %186 = vmatprep.subr.mxu0 0.0
  %187 = vmatpush1.msra.mxu0 0.0
  %188 = vmatprep.subr.mxu0 0.0
  %189 = vmatpush1.msra.mxu0 0.0
  %190 = vmatprep.subr.mxu0 0.0
  %191 = vmatpush1.msra.mxu0 0.0
  %192 = vmatprep.subr.mxu0 0.0
  %193 = vmatpush1.msra.mxu0 0.0
  %194 = vmatprep.subr.mxu0 0.0
  %195 = vmatpush1.msra.mxu0 0.0
  %196 = vmatprep.subr.mxu0 0.0
  %197 = vmatpush1.msra.mxu0 0.0
  %198 = vmatprep.mubr.f32.mxu0 0.0
  %199 = vmatmul.mubr.f32.gmra.mrb[0].mxu0 %v110
  %v200 = vpop.f32.mrb[0].mxu0
  %v201 = vadd.f32 %v132, %v200
  %v202 = vpop.f32.mrb[0].mxu0
  %203 = vdwg.mxu0
  %204 = vst [vmem:[%s5] sm:$0xff] %v201
  // Predicated region
  $region22: #{embed_fc.1} parent=0 // pred_check
    _
  $region23: #{embed_fc.1} parent=0 // pred_check_branch
    %206 = sbr.rel (0) target = $region25
  $region24: #{embed_fc.1} parent=0 // pred_region
    _
  $region25: #{embed_fc.1} parent=0 // pred_fallthru
    _
  // Predicated region
  $region26: #{embed_fc.1} parent=0 // pred_check
    _
  $region27: #{embed_fc.1} parent=0 // pred_check_branch
    %208 = sbr.rel (0) target = $region29
  $region28: #{embed_fc.1} parent=0 // pred_region
    _
  $region29: #{embed_fc.1} parent=0 // pred_fallthru
    _

</llo_original>
